<compile_context>
chip_gen: v6e
topology: v6e:2x2x1
jax: 0.10.0
libtpu: 0.0.40
codegen_flags: <defaults>
</compile_context>

<pallas_src>
import functools

import jax
import jax.numpy as jnp
from jax.experimental import pallas as pl
from jax.experimental.pallas import tpu as pltpu

BN_EPS = 1e-5
LANE = 128  # pad node count AND feature dims to 128 -> full MXU tiles, lane-dense stores

# Small insurance against older pallas-tpu namespaces.
_CompilerParams = getattr(pltpu, "CompilerParams", getattr(pltpu, "TPUCompilerParams", None))


def _round_up(v, m):
    return ((v + m - 1) // m) * m


def _gcn_fused_kernel(*refs, layer_meta):
    """All GCN layers fused; A_hat DMA overlapped with layer-0 X@W; everything resident in VMEM.

    refs = (adj_hbm, x, [W0, scale0, shift0], ..., [W_last, b_last], out, adj_vmem, sem)
    layer_meta[i] = (has_bn_relu, aggregate_first)
    """
    adj_hbm, x_ref = refs[0], refs[1]
    out_ref, adj_vmem, sem = refs[-3], refs[-2], refs[-1]
    params = refs[2:-3]

    # Kick off the dominant DMA (A_hat, 2*Np^2 bytes) and hide it behind layer-0 X@W.
    adj_copy = pltpu.make_async_copy(adj_hbm, adj_vmem, sem)
    adj_copy.start()

    h = x_ref[...]                       # bf16 [Np, F0_pad] activation, carried in bf16
    adj = None

    idx = 0
    for li, (has_bn_relu, aggregate_first) in enumerate(layer_meta):
        w = params[idx][...]; idx += 1                 # bf16 [Fin_pad, Fout_pad]
        if has_bn_relu:
            scale = params[idx][...]; idx += 1         # f32 [1, Fout_pad] = gamma*rsqrt(var+eps)
            shift = params[idx][...]; idx += 1         # f32 [1, Fout_pad] = beta - mean*scale + scale*bias
        else:
            b = params[idx][...]; idx += 1             # f32 [1, Fout_pad] (last layer only)

        if li == 0:
            # Transform-first so X@W0 overlaps the A_hat HBM->VMEM copy.
            t = jnp.dot(h, w, preferred_element_type=jnp.float32)
            adj_copy.wait()
            adj = adj_vmem[...]                        # bf16 [Np, Np], resident for all layers
            z = jnp.dot(adj, t.astype(jnp.bfloat16), preferred_element_type=jnp.float32)
        elif aggregate_first:
            # z = (A_hat @ H) @ W  — cheaper N^2 term when Fin_pad < Fout_pad
            agg = jnp.dot(adj, h, preferred_element_type=jnp.float32)
            z = jnp.dot(agg.astype(jnp.bfloat16), w, preferred_element_type=jnp.float32)
        else:
            # z = A_hat @ (H @ W)
            t = jnp.dot(h, w, preferred_element_type=jnp.float32)
            z = jnp.dot(adj, t.astype(jnp.bfloat16), preferred_element_type=jnp.float32)

        if has_bn_relu:
            # GCNConv bias folded into BN shift (wrapper); BN/ReLU math stays f32 (safe on v5e).
            z = jnp.maximum(z * scale + shift, 0.0)
            h = z.astype(jnp.bfloat16)                 # carry activation in bf16
            # dropout: identity in eval mode
        else:
            out_ref[...] = (z + b).astype(out_ref.dtype)   # lane-dense f32 store


class GCNPallas:
    """JAX/Pallas port of the PyTorch GCN module (eval-mode forward), fully fused."""

    def __init__(self, input_dim, hidden_dim, output_dim, num_layers, dropout, key):
        assert num_layers >= 2
        self.num_layers = num_layers
        self.dropout = dropout  # TODO(synk): unused — eval-mode (identity) dropout only
        self.input_dim = input_dim
        self.output_dim = output_dim

        dims = ([(input_dim, hidden_dim)]
                + [(hidden_dim, hidden_dim)] * (num_layers - 2)
                + [(hidden_dim, output_dim)])

        # Raw parameters: GCNConv glorot weights, zero bias, BatchNorm1d defaults.
        weights, biases = [], []
        for fi, fo in dims:
            key, wk = jax.random.split(key)
            s = jnp.sqrt(6.0 / (fi + fo))
            weights.append(jax.random.uniform(wk, (fi, fo), jnp.float32, -s, s))
            biases.append(jnp.zeros((fo,), jnp.float32))
        bn_gamma = [jnp.ones((hidden_dim,), jnp.float32) for _ in range(num_layers - 1)]
        bn_beta = [jnp.zeros((hidden_dim,), jnp.float32) for _ in range(num_layers - 1)]
        bn_mean = [jnp.zeros((hidden_dim,), jnp.float32) for _ in range(num_layers - 1)]
        bn_var = [jnp.ones((hidden_dim,), jnp.float32) for _ in range(num_layers - 1)]

        # Pre-pad to 128 lanes + pre-fuse BN (and GCNConv bias) constants ONCE.
        self.in_pad = _round_up(input_dim, LANE)
        self.out_pad = _round_up(output_dim, LANE)
        self.max_f_pad = max(_round_up(d, LANE) for pair in dims for d in pair)

        params, layer_meta = [], []
        for li, (fi, fo) in enumerate(dims):
            fi_pad, fo_pad = _round_up(fi, LANE), _round_up(fo, LANE)
            w_pad = jnp.zeros((fi_pad, fo_pad), jnp.float32).at[:fi, :fo].set(weights[li])
            params.append(w_pad.astype(jnp.bfloat16))
            last = li == num_layers - 1
            if not last:
                inv_std = jax.lax.rsqrt(bn_var[li] + BN_EPS)
                scale = bn_gamma[li] * inv_std
                # Fold GCNConv bias into the shift: BN(z + b) = scale*z + (beta - mean*scale + scale*b)
                shift = bn_beta[li] - bn_mean[li] * scale + scale * biases[li]
                # Padded lanes get scale=0, shift=0 so they remain exactly zero through ReLU.
                scale_pad = jnp.zeros((1, fo_pad), jnp.float32).at[0, :fo].set(scale)
                shift_pad = jnp.zeros((1, fo_pad), jnp.float32).at[0, :fo].set(shift)
                params += [scale_pad, shift_pad]
            else:
                b_pad = jnp.zeros((1, fo_pad), jnp.float32).at[0, :fo].set(biases[li])
                params.append(b_pad)
            # Layer 0 is always transform-first (its X@W hides the A_hat DMA).
            layer_meta.append((not last, li > 0 and fi_pad < fo_pad))
        self.params = params
        self.layer_meta = tuple(layer_meta)
        self._param_bytes = int(sum(p.size * p.dtype.itemsize for p in params))
        self._forward_jit = jax.jit(self._forward)

    def _forward(self, x, adj_t):
        n, f_in = x.shape
        n_pad = _round_up(n, LANE)

        # Pad node rows / feature lanes directly in bf16 (no f32 Np^2 intermediate).
        x_p = jnp.zeros((n_pad, self.in_pad), jnp.bfloat16).at[:n, :f_in].set(
            x.astype(jnp.bfloat16))
        adj_p = jnp.zeros((n_pad, n_pad), jnp.bfloat16).at[:n, :n].set(
            adj_t.astype(jnp.bfloat16))

        # VMEM budget from the actual resident footprint + headroom for live temporaries.
        resident = (2 * n_pad * n_pad                 # A_hat bf16 VMEM scratch
                    + 2 * n_pad * self.in_pad         # x bf16 input
                    + 4 * n_pad * self.out_pad        # f32 output
                    + self._param_bytes)
        headroom = 6 * 4 * n_pad * self.max_f_pad + (8 << 20)
        vmem_limit = int(min(resident + headroom, 64 << 20))   # <= v7x physical VMEM
        compiler_params = (_CompilerParams(vmem_limit_bytes=vmem_limit)
                           if _CompilerParams is not None else None)

        kernel = functools.partial(_gcn_fused_kernel, layer_meta=self.layer_meta)
        vmem = pl.BlockSpec(memory_space=pltpu.MemorySpace.VMEM)
        # TODO(synk): graphs whose A_hat exceeds VMEM (Np ~> 5.5k on v7x, ~> 8k on v5e/v6e)
        # need a per-layer (TM, TK)-tiled aggregation grid (parallel node-row axis so v7x's
        # 2 TensorCores split rows, arbitrary reduction axis last); this fused single-call
        # path targets the everything-resident small/medium-graph regime.
        out = pl.pallas_call(
            kernel,
            out_shape=jax.ShapeDtypeStruct((n_pad, self.out_pad), jnp.float32),
            in_specs=[pl.BlockSpec(memory_space=pl.ANY)]          # A_hat stays in HBM
                     + [vmem] * (1 + len(self.params)),           # x + all params in VMEM
            out_specs=vmem,
            scratch_shapes=[pltpu.VMEM((n_pad, n_pad), jnp.bfloat16),  # resident A_hat
                            pltpu.SemaphoreType.DMA],
            compiler_params=compiler_params,
        )(adj_p, x_p, *self.params)
        return out[:n, :self.output_dim]

    def __call__(self, x, adj_t):
        return self._forward_jit(x, adj_t)


def normalized_adjacency(key, n, p=0.15):
    """Dense A_hat = D^-1/2 (A + I) D^-1/2 from a random symmetric graph (glue)."""
    a = (jax.random.uniform(key, (n, n)) < p).astype(jnp.float32)
    a = jnp.maximum(a, a.T)                      # symmetrize
    a = a * (1.0 - jnp.eye(n)) + jnp.eye(n)      # add self-loops
    deg = jnp.sum(a, axis=1)
    d_inv_sqrt = jax.lax.rsqrt(deg)
    return a * d_inv_sqrt[:, None] * d_inv_sqrt[None, :]


if __name__ == "__main__":
    key = jax.random.PRNGKey(0)
    k_adj, k_x, k_model = jax.random.split(key, 3)

    # Small synthetic graph: 64 nodes, 16 input features.
    N, INPUT_DIM, HIDDEN_DIM, OUTPUT_DIM, NUM_LAYERS, DROPOUT = 64, 16, 32, 8, 3, 0.5

    adj_t = normalized_adjacency(k_adj, N)
    x = jax.random.normal(k_x, (N, INPUT_DIM), jnp.float32)

    model = GCNPallas(INPUT_DIM, HIDDEN_DIM, OUTPUT_DIM, NUM_LAYERS, DROPOUT, k_model)
    out = jax.block_until_ready(model(x, adj_t))
    assert out.shape == (N, OUTPUT_DIM) and out.dtype == jnp.float32
    assert bool(jnp.all(jnp.isfinite(out)))
    print("KERNEL_OK")
</pallas_src>

<mosaic_0001>
module attributes {stable_mosaic.version = 11 : i64} {
  func.func @_gcn_fused_kernel(%arg0: memref<128x128xbf16, #tpu.memory_space<any>>, %arg1: memref<128x128xbf16, #tpu.memory_space<vmem>>, %arg2: memref<128x128xbf16, #tpu.memory_space<vmem>>, %arg3: memref<1x128xf32, #tpu.memory_space<vmem>>, %arg4: memref<1x128xf32, #tpu.memory_space<vmem>>, %arg5: memref<128x128xbf16, #tpu.memory_space<vmem>>, %arg6: memref<1x128xf32, #tpu.memory_space<vmem>>, %arg7: memref<1x128xf32, #tpu.memory_space<vmem>>, %arg8: memref<128x128xbf16, #tpu.memory_space<vmem>>, %arg9: memref<1x128xf32, #tpu.memory_space<vmem>>, %arg10: memref<128x128xf32, #tpu.memory_space<vmem>>, %arg11: memref<128x128xbf16, #tpu.memory_space<vmem>>, %arg12: memref<!tpu.dma_semaphore, #tpu.memory_space<semaphore_mem>>) attributes {dimension_semantics = [], scalar_prefetch = 0 : i64, scratch_operands = 2 : i64, tpu.core_type = #tpu.core_type<tc>} {
    tpu.enqueue_dma source(%arg0 : memref<128x128xbf16, #tpu.memory_space<any>>) target(%arg11 : memref<128x128xbf16, #tpu.memory_space<vmem>>) target_semaphore(%arg12 : memref<!tpu.dma_semaphore, #tpu.memory_space<semaphore_mem>>)
    %c0 = arith.constant 0 : index
    %c0_0 = arith.constant 0 : index
    %0 = vector.load %arg1[%c0, %c0_0] : memref<128x128xbf16, #tpu.memory_space<vmem>>, vector<128x128xbf16>
    %c0_1 = arith.constant 0 : index
    %c0_2 = arith.constant 0 : index
    %1 = vector.load %arg2[%c0_1, %c0_2] : memref<128x128xbf16, #tpu.memory_space<vmem>>, vector<128x128xbf16>
    %c0_3 = arith.constant 0 : index
    %c0_4 = arith.constant 0 : index
    %2 = vector.load %arg3[%c0_3, %c0_4] : memref<1x128xf32, #tpu.memory_space<vmem>>, vector<1x128xf32>
    %c0_5 = arith.constant 0 : index
    %c0_6 = arith.constant 0 : index
    %3 = vector.load %arg4[%c0_5, %c0_6] : memref<1x128xf32, #tpu.memory_space<vmem>>, vector<1x128xf32>
    %cst = arith.constant dense<0.000000e+00> : vector<128x128xf32>
    %4 = tpu.matmul %0, %1, %cst {dimension_numbers = #tpu.dot_dimension_numbers<[1], [0], [0], [1], [0, 0, 1, 1], [], []>} : vector<128x128xbf16>, vector<128x128xbf16>, vector<128x128xf32> -> vector<128x128xf32>
    tpu.wait_dma2 semaphore(%arg12 : memref<!tpu.dma_semaphore, #tpu.memory_space<semaphore_mem>>) src(%arg0 : memref<128x128xbf16, #tpu.memory_space<any>>) dst(%arg11 : memref<128x128xbf16, #tpu.memory_space<vmem>>)
    %c0_7 = arith.constant 0 : index
    %c0_8 = arith.constant 0 : index
    %5 = vector.load %arg11[%c0_7, %c0_8] : memref<128x128xbf16, #tpu.memory_space<vmem>>, vector<128x128xbf16>
    %6 = arith.truncf %4 : vector<128x128xf32> to vector<128x128xbf16>
    %cst_9 = arith.constant dense<0.000000e+00> : vector<128x128xf32>
    %7 = tpu.matmul %5, %6, %cst_9 {dimension_numbers = #tpu.dot_dimension_numbers<[1], [0], [0], [1], [0, 0, 1, 1], [], []>} : vector<128x128xbf16>, vector<128x128xbf16>, vector<128x128xf32> -> vector<128x128xf32>
    %8 = vector.broadcast %2 : vector<1x128xf32> to vector<128x128xf32>
    %9 = arith.mulf %7, %8 : vector<128x128xf32>
    %10 = vector.broadcast %3 : vector<1x128xf32> to vector<128x128xf32>
    %11 = arith.addf %9, %10 : vector<128x128xf32>
    %cst_10 = arith.constant 0.000000e+00 : f32
    %12 = vector.broadcast %cst_10 : f32 to vector<128x128xf32>
    %13 = arith.maximumf %11, %12 : vector<128x128xf32>
    %14 = arith.truncf %13 : vector<128x128xf32> to vector<128x128xbf16>
    %c0_11 = arith.constant 0 : index
    %c0_12 = arith.constant 0 : index
    %15 = vector.load %arg5[%c0_11, %c0_12] : memref<128x128xbf16, #tpu.memory_space<vmem>>, vector<128x128xbf16>
    %c0_13 = arith.constant 0 : index
    %c0_14 = arith.constant 0 : index
    %16 = vector.load %arg6[%c0_13, %c0_14] : memref<1x128xf32, #tpu.memory_space<vmem>>, vector<1x128xf32>
    %c0_15 = arith.constant 0 : index
    %c0_16 = arith.constant 0 : index
    %17 = vector.load %arg7[%c0_15, %c0_16] : memref<1x128xf32, #tpu.memory_space<vmem>>, vector<1x128xf32>
    %cst_17 = arith.constant dense<0.000000e+00> : vector<128x128xf32>
    %18 = tpu.matmul %14, %15, %cst_17 {dimension_numbers = #tpu.dot_dimension_numbers<[1], [0], [0], [1], [0, 0, 1, 1], [], []>} : vector<128x128xbf16>, vector<128x128xbf16>, vector<128x128xf32> -> vector<128x128xf32>
    %19 = arith.truncf %18 : vector<128x128xf32> to vector<128x128xbf16>
    %cst_18 = arith.constant dense<0.000000e+00> : vector<128x128xf32>
    %20 = tpu.matmul %5, %19, %cst_18 {dimension_numbers = #tpu.dot_dimension_numbers<[1], [0], [0], [1], [0, 0, 1, 1], [], []>} : vector<128x128xbf16>, vector<128x128xbf16>, vector<128x128xf32> -> vector<128x128xf32>
    %21 = vector.broadcast %16 : vector<1x128xf32> to vector<128x128xf32>
    %22 = arith.mulf %20, %21 : vector<128x128xf32>
    %23 = vector.broadcast %17 : vector<1x128xf32> to vector<128x128xf32>
    %24 = arith.addf %22, %23 : vector<128x128xf32>
    %cst_19 = arith.constant 0.000000e+00 : f32
    %25 = vector.broadcast %cst_19 : f32 to vector<128x128xf32>
    %26 = arith.maximumf %24, %25 : vector<128x128xf32>
    %27 = arith.truncf %26 : vector<128x128xf32> to vector<128x128xbf16>
    %c0_20 = arith.constant 0 : index
    %c0_21 = arith.constant 0 : index
    %28 = vector.load %arg8[%c0_20, %c0_21] : memref<128x128xbf16, #tpu.memory_space<vmem>>, vector<128x128xbf16>
    %c0_22 = arith.constant 0 : index
    %c0_23 = arith.constant 0 : index
    %29 = vector.load %arg9[%c0_22, %c0_23] : memref<1x128xf32, #tpu.memory_space<vmem>>, vector<1x128xf32>
    %cst_24 = arith.constant dense<0.000000e+00> : vector<128x128xf32>
    %30 = tpu.matmul %27, %28, %cst_24 {dimension_numbers = #tpu.dot_dimension_numbers<[1], [0], [0], [1], [0, 0, 1, 1], [], []>} : vector<128x128xbf16>, vector<128x128xbf16>, vector<128x128xf32> -> vector<128x128xf32>
    %31 = arith.truncf %30 : vector<128x128xf32> to vector<128x128xbf16>
    %cst_25 = arith.constant dense<0.000000e+00> : vector<128x128xf32>
    %32 = tpu.matmul %5, %31, %cst_25 {dimension_numbers = #tpu.dot_dimension_numbers<[1], [0], [0], [1], [0, 0, 1, 1], [], []>} : vector<128x128xbf16>, vector<128x128xbf16>, vector<128x128xf32> -> vector<128x128xf32>
    %33 = vector.broadcast %29 : vector<1x128xf32> to vector<128x128xf32>
    %34 = arith.addf %32, %33 : vector<128x128xf32>
    %c0_26 = arith.constant 0 : index
    %c0_27 = arith.constant 0 : index
    %35 = vector.load %arg10[%c0_26, %c0_27] : memref<128x128xf32, #tpu.memory_space<vmem>>, vector<128x128xf32>
    tpu.vector_store %arg10[%c0_26, %c0_27], %34 {strides = array<i32>} : memref<128x128xf32, #tpu.memory_space<vmem>>, vector<128x128xf32>,
    return
  }
}

</mosaic_0001>

<llo_original>
// kernel: _forward.1
$region0: #{_forward.1}
  #allocation0 [shape = 'u32[]', space=smem, size = 0x4, offset = 0x4, fixed_abs, tag = 'smem constant byte address 0x4 - core index']
  #allocation1 [shape = 'u32[144,128]{1,0:T(1,128)}', space=vmem, size = 0x12000, scoped, tag = 'internal scratch']
  #allocation2 [shape = 'bf16[128,128]{1,0:T(8,128)(2,1)}', space=vmem, size = 0x8000, scoped, tag = 'scratch operand']
  #allocation3 [shape = 's32[1]{0}', space=sflag, size = 0x4, scoped, tag = 'scratch operand']
  #allocation4 [shape = 's32[]', space=sflag, size = 0x4, offset = 0, fixed_abs, tag = 'sflag constant byte address 0x0 - dummy sync flag']
  %s0 = inlined_call_operand.vmem [shape: bf16[128,128], index: 0, kind: input, shape index: {}]
  %s1 = inlined_call_operand.vmem [shape: bf16[128,128], index: 1, kind: input, shape index: {}]
  %s2 = inlined_call_operand.vmem [shape: bf16[128,128], index: 2, kind: input, shape index: {}]
  %s3 = inlined_call_operand.vmem [shape: f32[1,128], index: 3, kind: input, shape index: {}, may-alias: {3,6}]
  %s4 = inlined_call_operand.vmem [shape: f32[1,128], index: 4, kind: input, shape index: {}, may-alias: {4,7,9}]
  %s5 = inlined_call_operand.vmem [shape: bf16[128,128], index: 5, kind: input, shape index: {}]
  %s6 = inlined_call_operand.vmem [shape: f32[1,128], index: 6, kind: input, shape index: {}, may-alias: {3,6}]
  %s7 = inlined_call_operand.vmem [shape: f32[1,128], index: 7, kind: input, shape index: {}, may-alias: {4,7,9}]
  %s8 = inlined_call_operand.vmem [shape: bf16[128,128], index: 8, kind: input, shape index: {}]
  %s9 = inlined_call_operand.vmem [shape: f32[1,128], index: 9, kind: input, shape index: {}, may-alias: {4,7,9}]
  %s10 = inlined_call_operand.vmem [shape: f32[128,128], index: 10, kind: output, shape index: {}]
  %s11 = sld [smem:[#allocation0]]
  $region80: #{_forward.1} parent=0
    _
  %s13 = ssub.s32 1, %s11
  %s14 = scalar_select 0, %s13, %s11
  // Predicated region
  $region2: #{_forward.1} parent=0 // pred_check
    _
  $region3: #{_forward.1} parent=0 // pred_check_branch
    %16 = sbr.rel (0) target = $region5
  $region4: #{_forward.1} parent=0 // pred_region
    _
  $region5: #{_forward.1} parent=0 // pred_fallthru
    _
  // Predicated region
  $region6: #{_forward.1} parent=0 // pred_check
    _
  $region7: #{_forward.1} parent=0 // pred_check_branch
    %18 = sbr.rel (0) target = $region9
  $region8: #{_forward.1} parent=0 // pred_region
    _
  $region9: #{_forward.1} parent=0 // pred_fallthru
    _
  // Predicated region
  $region10: #{_forward.1} parent=0 // pred_check
    _
  $region11: #{_forward.1} parent=0 // pred_check_branch
    %20 = sbr.rel (0) target = $region13
  $region12: #{_forward.1} parent=0 // pred_region
    _
  $region13: #{_forward.1} parent=0 // pred_fallthru
    _
  // Predicated region
  $region14: #{_forward.1} parent=0 // pred_check
    _
  $region15: #{_forward.1} parent=0 // pred_check_branch
    %22 = sbr.rel (0) target = $region17
  $region16: #{_forward.1} parent=0 // pred_region
    _
  $region17: #{_forward.1} parent=0 // pred_fallthru
    _
  // Predicated region
  $region18: #{_forward.1} parent=0 // pred_check
    _
  $region19: #{_forward.1} parent=0 // pred_check_branch
    %24 = sbr.rel (0) target = $region21
  $region20: #{_forward.1} parent=0 // pred_region
    _
  $region21: #{_forward.1} parent=0 // pred_fallthru
    _
  // Predicated region
  $region22: #{_forward.1} parent=0 // pred_check
    _
  $region23: #{_forward.1} parent=0 // pred_check_branch
    %26 = sbr.rel (0) target = $region25
  $region24: #{_forward.1} parent=0 // pred_region
    _
  $region25: #{_forward.1} parent=0 // pred_fallthru
    _
  // Predicated region
  $region26: #{_forward.1} parent=0 // pred_check
    _
  $region27: #{_forward.1} parent=0 // pred_check_branch
    %28 = sbr.rel (0) target = $region29
  $region28: #{_forward.1} parent=0 // pred_region
    _
  $region29: #{_forward.1} parent=0 // pred_fallthru
    _
  // Predicated region
  $region30: #{_forward.1} parent=0 // pred_check
    _
  $region31: #{_forward.1} parent=0 // pred_check_branch
    %30 = sbr.rel (0) target = $region33
  $region32: #{_forward.1} parent=0 // pred_region
    _
  $region33: #{_forward.1} parent=0 // pred_fallthru
    _
  // Predicated region
  $region34: #{_forward.1} parent=0 // pred_check
    _
  $region35: #{_forward.1} parent=0 // pred_check_branch
    %32 = sbr.rel (0) target = $region37
  $region36: #{_forward.1} parent=0 // pred_region
    _
  $region37: #{_forward.1} parent=0 // pred_fallthru
    _
  %p35 = scmp.lt.u32.totalorder 64, 8
  %p36 = pneg %p35
  // Predicated region
  $region38: #{_forward.1} parent=0 // pred_check
    _
  $region39: #{_forward.1} parent=0 // pred_check_branch
    %38 = sbr.rel (%p35) target = $region41
  $region40: #{_forward.1} parent=0 // pred_region
    %s54 = sand.u32 64, 7
    %p55 = scmp.eq.s32.totalorder %s54, 0
    // Predicated region
    $region53: #{_forward.1} parent=40 // pred_check
      %p56 = pneg %p55
    $region54: #{_forward.1} parent=40 // pred_check_branch
      %58 = sbr.rel (%p56) target = $region56
    $region55: #{_forward.1} parent=40 // pred_region
      loop: start=0, step=1, limit=1
      $region57: #{_forward.1} parent=55 // loop_pre_header
        _
      $region58: #{_forward.1} parent=55 // loop_header
        %s60 = sphi 0, %s64
        %p61 = scmp.ge.s32.totalorder %s60, 1
        %s65 = sphi %s0, %s0
        %s66 = sphi [#allocation2], [#allocation2]
      $region59: #{_forward.1} parent=55 // loop_header_branch
        %63 = sbr.rel (%p61) target = $region63
      $region60: #{_forward.1} parent=55 // loop_body
        %v67 = vld [vmem:[%s65] sm:$0xff]
        %68 = vst [vmem:[%s66] sm:$0xff] %v67
        %v69 = vld [vmem:[%s65 + $0x8] sm:$0xff]
        %70 = vst [vmem:[%s66 + $0x8] sm:$0xff] %v69
        %v71 = vld [vmem:[%s65 + $0x10] sm:$0xff]
        %72 = vst [vmem:[%s66 + $0x10] sm:$0xff] %v71
        %v73 = vld [vmem:[%s65 + $0x18] sm:$0xff]
        %74 = vst [vmem:[%s66 + $0x18] sm:$0xff] %v73
        %v75 = vld [vmem:[%s65 + $0x20] sm:$0xff]
        %76 = vst [vmem:[%s66 + $0x20] sm:$0xff] %v75
        %v77 = vld [vmem:[%s65 + $0x28] sm:$0xff]
        %78 = vst [vmem:[%s66 + $0x28] sm:$0xff] %v77
        %v79 = vld [vmem:[%s65 + $0x30] sm:$0xff]
        %80 = vst [vmem:[%s66 + $0x30] sm:$0xff] %v79
        %v81 = vld [vmem:[%s65 + $0x38] sm:$0xff]
        %82 = vst [vmem:[%s66 + $0x38] sm:$0xff] %v81
      $region61: #{_forward.1} parent=55 // loop_footer
        %s64 = sadd.s32 1, %s60
      $region62: #{_forward.1} parent=55 // loop_footer_branch
        %59 = sbr.rel target = $region58
      $region63: #{_forward.1} parent=55 // loop_exit
        _
    $region56: #{_forward.1} parent=40 // pred_fallthru
      _
    %p83 = pneg %p55
    // Predicated region
    $region64: #{_forward.1} parent=40 // pred_check
      _
    $region65: #{_forward.1} parent=40 // pred_check_branch
      %85 = sbr.rel (%p55) target = $region67
    $region66: #{_forward.1} parent=40 // pred_region
      %s86 = sand.u32 64, 7
    $region67: #{_forward.1} parent=40 // pred_fallthru
      _
  $region41: #{_forward.1} parent=0 // pred_fallthru
    _
  // Predicated region
  $region42: #{_forward.1} parent=0 // pred_check
    %p39 = pneg %p35
  $region43: #{_forward.1} parent=0 // pred_check_branch
    %41 = sbr.rel (%p39) target = $region45
  $region44: #{_forward.1} parent=0 // pred_region
    %s42 = sshll.u32 1, 64
    %s43 = ssub.s32 %s42, 1
    loop: start=0, step=1, limit=1
    $region46: #{_forward.1} parent=44 // loop_pre_header
      _
    $region47: #{_forward.1} parent=44 // loop_header
      %s45 = sphi 0, %s49
      %p46 = scmp.ge.s32.totalorder %s45, 1
      %s50 = sphi %s0, %s0
      %s51 = sphi [#allocation2], [#allocation2]
    $region48: #{_forward.1} parent=44 // loop_header_branch
      %48 = sbr.rel (%p46) target = $region52
    $region49: #{_forward.1} parent=44 // loop_body
      %v52 = vld [vmem:[%s50] sm:%s43]
      %53 = vst [vmem:[%s51] sm:%s43] %v52
    $region50: #{_forward.1} parent=44 // loop_footer
      %s49 = sadd.s32 1, %s45
    $region51: #{_forward.1} parent=44 // loop_footer_branch
      %44 = sbr.rel target = $region47
    $region52: #{_forward.1} parent=44 // loop_exit
      _
  $region45: #{_forward.1} parent=0 // pred_fallthru
    _
  // Predicated region
  $region68: #{_forward.1} parent=0 // pred_check
    _
  $region69: #{_forward.1} parent=0 // pred_check_branch
    %89 = sbr.rel (0) target = $region71
  $region70: #{_forward.1} parent=0 // pred_region
    %90 = vsyncadd [#allocation3], 1024
  $region71: #{_forward.1} parent=0 // pred_fallthru
    _
  %v91 = vld [vmem:[%s1] sm:$0xf]
  %v92 = vld [vmem:[%s1 + $0x4] sm:$0xf]
  %v93 = vld [vmem:[%s1 + $0x8] sm:$0xf]
  %v94 = vld [vmem:[%s1 + $0xc] sm:$0xf]
  %v95 = vld [vmem:[%s1 + $0x10] sm:$0xf]
  %v96 = vld [vmem:[%s1 + $0x14] sm:$0xf]
  %v97 = vld [vmem:[%s1 + $0x18] sm:$0xf]
  %v98 = vld [vmem:[%s1 + $0x1c] sm:$0xf]
  %v99 = vld [vmem:[%s1 + $0x20] sm:$0xf]
  %v100 = vld [vmem:[%s1 + $0x24] sm:$0xf]
  %v101 = vld [vmem:[%s1 + $0x28] sm:$0xf]
  %v102 = vld [vmem:[%s1 + $0x2c] sm:$0xf]
  %v103 = vld [vmem:[%s1 + $0x30] sm:$0xf]
  %v104 = vld [vmem:[%s1 + $0x34] sm:$0xf]
  %v105 = vld [vmem:[%s1 + $0x38] sm:$0xf]
  %v106 = vld [vmem:[%s1 + $0x3c] sm:$0xf]
  %v107 = vld [vmem:[%s2] sm:$0xf]
  %v108 = vld [vmem:[%s2 + $0x4] sm:$0xf]
  %v109 = vld [vmem:[%s2 + $0x8] sm:$0xf]
  %v110 = vld [vmem:[%s2 + $0xc] sm:$0xf]
  %v111 = vld [vmem:[%s2 + $0x10] sm:$0xf]
  %v112 = vld [vmem:[%s2 + $0x14] sm:$0xf]
  %v113 = vld [vmem:[%s2 + $0x18] sm:$0xf]
  %v114 = vld [vmem:[%s2 + $0x1c] sm:$0xf]
  %v115 = vld [vmem:[%s2 + $0x20] sm:$0xf]
  %v116 = vld [vmem:[%s2 + $0x24] sm:$0xf]
  %v117 = vld [vmem:[%s2 + $0x28] sm:$0xf]
  %v118 = vld [vmem:[%s2 + $0x2c] sm:$0xf]
  %v119 = vld [vmem:[%s2 + $0x30] sm:$0xf]
  %v120 = vld [vmem:[%s2 + $0x34] sm:$0xf]
  %v121 = vld [vmem:[%s2 + $0x38] sm:$0xf]
  %v122 = vld [vmem:[%s2 + $0x3c] sm:$0xf]
  %v123 = vld [vmem:[%s3] sm:$0x1]
  %v124 = vld [vmem:[%s4] sm:$0x1]
  %v141 = vunpack.c.l.b16 %v91
  %v142 = vunpack.c.l.b16 %v92
  %v143 = vunpack.c.l.b16 %v93
  %v144 = vunpack.c.l.b16 %v94
  %v145 = vunpack.c.l.b16 %v95
  %v146 = vunpack.c.l.b16 %v96
  %v147 = vunpack.c.l.b16 %v97
  %v148 = vunpack.c.l.b16 %v98
  %v149 = vunpack.c.l.b16 %v99
  %v150 = vunpack.c.l.b16 %v100
  %v151 = vunpack.c.l.b16 %v101
  %v152 = vunpack.c.l.b16 %v102
  %v153 = vunpack.c.l.b16 %v103
  %v154 = vunpack.c.l.b16 %v104
  %v155 = vunpack.c.l.b16 %v105
  %v156 = vunpack.c.l.b16 %v106
  %v157 = vpack.c.b16 %v142, %v141
  %v158 = vpack.c.b16 %v144, %v143
  %v159 = vpack.c.b16 %v146, %v145
  %v160 = vpack.c.b16 %v148, %v147
  %v161 = vpack.c.b16 %v150, %v149
  %v162 = vpack.c.b16 %v152, %v151
  %v163 = vpack.c.b16 %v154, %v153
  %v164 = vpack.c.b16 %v156, %v155
  %v189 = vunpack.c.l.b16 %v107
  %v190 = vunpack.c.l.b16 %v108
  %v191 = vunpack.c.l.b16 %v109
  %v192 = vunpack.c.l.b16 %v110
  %v193 = vunpack.c.l.b16 %v111
  %v194 = vunpack.c.l.b16 %v112
  %v195 = vunpack.c.l.b16 %v113
  %v196 = vunpack.c.l.b16 %v114
  %v197 = vunpack.c.l.b16 %v115
  %v198 = vunpack.c.l.b16 %v116
  %v199 = vunpack.c.l.b16 %v117
  %v200 = vunpack.c.l.b16 %v118
  %v201 = vunpack.c.l.b16 %v119
  %v202 = vunpack.c.l.b16 %v120
  %v203 = vunpack.c.l.b16 %v121
  %v204 = vunpack.c.l.b16 %v122
  %v205 = vpack.c.b16 %v190, %v189
  %v206 = vpack.c.b16 %v192, %v191
  %v207 = vpack.c.b16 %v194, %v193
  %v208 = vpack.c.b16 %v196, %v195
  %v209 = vpack.c.b16 %v198, %v197
  %v210 = vpack.c.b16 %v200, %v199
  %v211 = vpack.c.b16 %v202, %v201
  %v212 = vpack.c.b16 %v204, %v203
  %221 = vmatprep.subr.bf16.mxu0 0
  %222 = vmatpush1.bf16.msra.mxu0 %v212
  %223 = vmatprep.subr.bf16.mxu0 0
  %224 = vmatpush1.bf16.msra.mxu0 %v211
  %225 = vmatprep.subr.bf16.mxu0 0
  %226 = vmatpush1.bf16.msra.mxu0 %v210
  %227 = vmatprep.subr.bf16.mxu0 0
  %228 = vmatpush1.bf16.msra.mxu0 %v209
  %229 = vmatprep.subr.bf16.mxu0 0
  %230 = vmatpush1.bf16.msra.mxu0 %v208
  %231 = vmatprep.subr.bf16.mxu0 0
  %232 = vmatpush1.bf16.msra.mxu0 %v207
  %233 = vmatprep.subr.bf16.mxu0 0
  %234 = vmatpush1.bf16.msra.mxu0 %v206
  %235 = vmatprep.subr.bf16.mxu0 0
  %236 = vmatpush1.bf16.msra.mxu0 %v205
  %237 = vmatprep.subr.bf16.mxu0 0
  %238 = vmatpush2.bf16.msra.mxu0 0
  %239 = vmatprep.subr.bf16.mxu0 0
  %240 = vmatpush2.bf16.msra.mxu0 0
  %241 = vmatprep.subr.bf16.mxu0 0
  %242 = vmatpush2.bf16.msra.mxu0 0
  %243 = vmatprep.subr.bf16.mxu0 0
  %244 = vmatpush2.bf16.msra.mxu0 0
  %245 = vmatprep.subr.bf16.mxu0 0
  %246 = vmatpush2.bf16.msra.mxu0 0
  %247 = vmatprep.subr.bf16.mxu0 0
  %248 = vmatpush2.bf16.msra.mxu0 0
  %249 = vmatprep.subr.bf16.mxu0 0
  %250 = vmatpush2.bf16.msra.mxu0 0
  %251 = vmatprep.subr.bf16.mxu0 0
  %252 = vmatpush2.bf16.msra.mxu0 0
  %253 = vmatprep.mubr.bf16.mxu0 0
  %254 = vmatmul.mubr.bf16.gmra.mxu0 %v157
  %v255 = vpop.f32.mrf.mxu0
  %v256 = vadd.f32 0.0, %v255
  %v257 = vpop.f32.mrf.mxu0
  %v258 = vpop.f32.mrf.mxu0
  %v259 = vadd.f32 0.0, %v258
  %v260 = vpop.f32.mrf.mxu0
  %261 = vmatprep.mubr.bf16.mxu0 0
  %262 = vmatmul.mubr.bf16.gmra.mxu0 %v158
  %v263 = vpop.f32.mrf.mxu0
  %v264 = vadd.f32 0.0, %v263
  %v265 = vpop.f32.mrf.mxu0
  %v266 = vpop.f32.mrf.mxu0
  %v267 = vadd.f32 0.0, %v266
  %v268 = vpop.f32.mrf.mxu0
  %269 = vmatprep.mubr.bf16.mxu0 0
  %270 = vmatmul.mubr.bf16.gmra.mxu0 %v159
  %v271 = vpop.f32.mrf.mxu0
  %v272 = vadd.f32 0.0, %v271
  %v273 = vpop.f32.mrf.mxu0
  %v274 = vpop.f32.mrf.mxu0
  %v275 = vadd.f32 0.0, %v274
  %v276 = vpop.f32.mrf.mxu0
  %277 = vmatprep.mubr.bf16.mxu0 0
  %278 = vmatmul.mubr.bf16.gmra.mxu0 %v160
  %v279 = vpop.f32.mrf.mxu0
  %v280 = vadd.f32 0.0, %v279
  %v281 = vpop.f32.mrf.mxu0
  %v282 = vpop.f32.mrf.mxu0
  %v283 = vadd.f32 0.0, %v282
  %v284 = vpop.f32.mrf.mxu0
  %285 = vmatprep.mubr.bf16.mxu0 0
  %286 = vmatmul.mubr.bf16.gmra.mxu0 %v161
  %v287 = vpop.f32.mrf.mxu0
  %v288 = vadd.f32 0.0, %v287
  %v289 = vpop.f32.mrf.mxu0
  %v290 = vpop.f32.mrf.mxu0
  %v291 = vadd.f32 0.0, %v290
  %v292 = vpop.f32.mrf.mxu0
  %293 = vmatprep.mubr.bf16.mxu0 0
  %294 = vmatmul.mubr.bf16.gmra.mxu0 %v162
  %v295 = vpop.f32.mrf.mxu0
  %v296 = vadd.f32 0.0, %v295
  %v297 = vpop.f32.mrf.mxu0
  %v298 = vpop.f32.mrf.mxu0
  %v299 = vadd.f32 0.0, %v298
  %v300 = vpop.f32.mrf.mxu0
  %301 = vmatprep.mubr.bf16.mxu0 0
  %302 = vmatmul.mubr.bf16.gmra.mxu0 %v163
  %v303 = vpop.f32.mrf.mxu0
  %v304 = vadd.f32 0.0, %v303
  %v305 = vpop.f32.mrf.mxu0
  %v306 = vpop.f32.mrf.mxu0
  %v307 = vadd.f32 0.0, %v306
  %v308 = vpop.f32.mrf.mxu0
  %309 = vmatprep.mubr.bf16.mxu0 0
  %310 = vmatmul.mubr.bf16.gmra.mxu0 %v164
  %v311 = vpop.f32.mrf.mxu0
  %v312 = vadd.f32 0.0, %v311
  %v313 = vpop.f32.mrf.mxu0
  %v314 = vpop.f32.mrf.mxu0
  %v315 = vadd.f32 0.0, %v314
  %v316 = vpop.f32.mrf.mxu0
  %317 = vdwg.mxu0
  %s318 = smul.u32 4, 16
  %s319 = smul.u32 %s318, 1
  %s320 = sshll.u32 %s319, 4
  %321 = dma.done [#allocation3], %s320
  %v322 = vld [vmem:[#allocation2] sm:$0xf]
  %v323 = vld [vmem:[#allocation2 + $0x4] sm:$0xf]
  %v324 = vld [vmem:[#allocation2 + $0x8] sm:$0xf]
  %v325 = vld [vmem:[#allocation2 + $0xc] sm:$0xf]
  %v326 = vld [vmem:[#allocation2 + $0x10] sm:$0xf]
  %v327 = vld [vmem:[#allocation2 + $0x14] sm:$0xf]
  %v328 = vld [vmem:[#allocation2 + $0x18] sm:$0xf]
  %v329 = vld [vmem:[#allocation2 + $0x1c] sm:$0xf]
  %v330 = vld [vmem:[#allocation2 + $0x20] sm:$0xf]
  %v331 = vld [vmem:[#allocation2 + $0x24] sm:$0xf]
  %v332 = vld [vmem:[#allocation2 + $0x28] sm:$0xf]
  %v333 = vld [vmem:[#allocation2 + $0x2c] sm:$0xf]
  %v334 = vld [vmem:[#allocation2 + $0x30] sm:$0xf]
  %v335 = vld [vmem:[#allocation2 + $0x34] sm:$0xf]
  %v336 = vld [vmem:[#allocation2 + $0x38] sm:$0xf]
  %v337 = vld [vmem:[#allocation2 + $0x3c] sm:$0xf]
  %v338 = vpack.c.bf16 %v259, %v256
  %v339 = vpack.c.bf16 %v267, %v264
  %v340 = vpack.c.bf16 %v275, %v272
  %v341 = vpack.c.bf16 %v283, %v280
  %v342 = vpack.c.bf16 %v291, %v288
  %v343 = vpack.c.bf16 %v299, %v296
  %v344 = vpack.c.bf16 %v307, %v304
  %v345 = vpack.c.bf16 %v315, %v312
  %v362 = vunpack.c.l.b16 %v322
  %v363 = vunpack.c.l.b16 %v323
  %v364 = vunpack.c.l.b16 %v324
  %v365 = vunpack.c.l.b16 %v325
  %v366 = vunpack.c.l.b16 %v326
  %v367 = vunpack.c.l.b16 %v327
  %v368 = vunpack.c.l.b16 %v328
  %v369 = vunpack.c.l.b16 %v329
  %v370 = vunpack.c.l.b16 %v330
  %v371 = vunpack.c.l.b16 %v331
  %v372 = vunpack.c.l.b16 %v332
  %v373 = vunpack.c.l.b16 %v333
  %v374 = vunpack.c.l.b16 %v334
  %v375 = vunpack.c.l.b16 %v335
  %v376 = vunpack.c.l.b16 %v336
  %v377 = vunpack.c.l.b16 %v337
  %v378 = vpack.c.b16 %v363, %v362
  %v379 = vpack.c.b16 %v365, %v364
  %v380 = vpack.c.b16 %v367, %v366
  %v381 = vpack.c.b16 %v369, %v368
  %v382 = vpack.c.b16 %v371, %v370
  %v383 = vpack.c.b16 %v373, %v372
  %v384 = vpack.c.b16 %v375, %v374
  %v385 = vpack.c.b16 %v377, %v376
  %394 = vmatprep.subr.bf16.mxu0 0
  %395 = vmatpush1.bf16.msra.mxu0 %v345
  %396 = vmatprep.subr.bf16.mxu0 0
  %397 = vmatpush1.bf16.msra.mxu0 %v344
  %398 = vmatprep.subr.bf16.mxu0 0
  %399 = vmatpush1.bf16.msra.mxu0 %v343
  %400 = vmatprep.subr.bf16.mxu0 0
  %401 = vmatpush1.bf16.msra.mxu0 %v342
  %402 = vmatprep.subr.bf16.mxu0 0
  %403 = vmatpush1.bf16.msra.mxu0 %v341
  %404 = vmatprep.subr.bf16.mxu0 0
  %405 = vmatpush1.bf16.msra.mxu0 %v340
  %406 = vmatprep.subr.bf16.mxu0 0
  %407 = vmatpush1.bf16.msra.mxu0 %v339
  %408 = vmatprep.subr.bf16.mxu0 0
  %409 = vmatpush1.bf16.msra.mxu0 %v338
  %410 = vmatprep.subr.bf16.mxu0 0
  %411 = vmatpush2.bf16.msra.mxu0 0
  %412 = vmatprep.subr.bf16.mxu0 0
  %413 = vmatpush2.bf16.msra.mxu0 0
  %414 = vmatprep.subr.bf16.mxu0 0
  %415 = vmatpush2.bf16.msra.mxu0 0
  %416 = vmatprep.subr.bf16.mxu0 0
  %417 = vmatpush2.bf16.msra.mxu0 0
  %418 = vmatprep.subr.bf16.mxu0 0
  %419 = vmatpush2.bf16.msra.mxu0 0
  %420 = vmatprep.subr.bf16.mxu0 0
  %421 = vmatpush2.bf16.msra.mxu0 0
  %422 = vmatprep.subr.bf16.mxu0 0
  %423 = vmatpush2.bf16.msra.mxu0 0
  %424 = vmatprep.subr.bf16.mxu0 0
  %425 = vmatpush2.bf16.msra.mxu0 0
  %426 = vmatprep.mubr.bf16.mxu0 0
  %427 = vmatmul.mubr.bf16.gmra.mxu0 %v378
  %v428 = vpop.f32.mrf.mxu0
  %v429 = vadd.f32 0.0, %v428
  %v430 = vpop.f32.mrf.mxu0
  %v431 = vpop.f32.mrf.mxu0
  %v432 = vadd.f32 0.0, %v431
  %v433 = vpop.f32.mrf.mxu0
  %434 = vmatprep.mubr.bf16.mxu0 0
  %435 = vmatmul.mubr.bf16.gmra.mxu0 %v379
  %v436 = vpop.f32.mrf.mxu0
  %v437 = vadd.f32 0.0, %v436
  %v438 = vpop.f32.mrf.mxu0
  %v439 = vpop.f32.mrf.mxu0
  %v440 = vadd.f32 0.0, %v439
  %v441 = vpop.f32.mrf.mxu0
  %442 = vmatprep.mubr.bf16.mxu0 0
  %443 = vmatmul.mubr.bf16.gmra.mxu0 %v380
  %v444 = vpop.f32.mrf.mxu0
  %v445 = vadd.f32 0.0, %v444
  %v446 = vpop.f32.mrf.mxu0
  %v447 = vpop.f32.mrf.mxu0
  %v448 = vadd.f32 0.0, %v447
  %v449 = vpop.f32.mrf.mxu0
  %450 = vmatprep.mubr.bf16.mxu0 0
  %451 = vmatmul.mubr.bf16.gmra.mxu0 %v381
  %v452 = vpop.f32.mrf.mxu0
  %v453 = vadd.f32 0.0, %v452
  %v454 = vpop.f32.mrf.mxu0
  %v455 = vpop.f32.mrf.mxu0
  %v456 = vadd.f32 0.0, %v455
  %v457 = vpop.f32.mrf.mxu0
  %458 = vmatprep.mubr.bf16.mxu0 0
  %459 = vmatmul.mubr.bf16.gmra.mxu0 %v382
  %v460 = vpop.f32.mrf.mxu0
  %v461 = vadd.f32 0.0, %v460
  %v462 = vpop.f32.mrf.mxu0
  %v463 = vpop.f32.mrf.mxu0
  %v464 = vadd.f32 0.0, %v463
  %v465 = vpop.f32.mrf.mxu0
  %466 = vmatprep.mubr.bf16.mxu0 0
  %467 = vmatmul.mubr.bf16.gmra.mxu0 %v383
  %v468 = vpop.f32.mrf.mxu0
  %v469 = vadd.f32 0.0, %v468
  %v470 = vpop.f32.mrf.mxu0
  %v471 = vpop.f32.mrf.mxu0
  %v472 = vadd.f32 0.0, %v471
  %v473 = vpop.f32.mrf.mxu0
  %474 = vmatprep.mubr.bf16.mxu0 0
  %475 = vmatmul.mubr.bf16.gmra.mxu0 %v384
  %v476 = vpop.f32.mrf.mxu0
  %v477 = vadd.f32 0.0, %v476
  %v478 = vpop.f32.mrf.mxu0
  %v479 = vpop.f32.mrf.mxu0
  %v480 = vadd.f32 0.0, %v479
  %v481 = vpop.f32.mrf.mxu0
  %482 = vmatprep.mubr.bf16.mxu0 0
  %483 = vmatmul.mubr.bf16.gmra.mxu0 %v385
  %v484 = vpop.f32.mrf.mxu0
  %v485 = vadd.f32 0.0, %v484
  %v486 = vpop.f32.mrf.mxu0
  %v487 = vpop.f32.mrf.mxu0
  %v488 = vadd.f32 0.0, %v487
  %v489 = vpop.f32.mrf.mxu0
  %490 = vdwg.mxu0
  %v492 = vlaneseq
  %v493 = vshrl.u32 %v492, 7
  %v494 = vsub.s32 0, %v493
  %v495 = vrot.slane %v123, %v494
  %v497 = vmul.f32 %v429, %v495
  %v498 = vmul.f32 %v432, %v495
  %v499 = vmul.f32 %v437, %v495
  %v500 = vmul.f32 %v440, %v495
  %v501 = vmul.f32 %v445, %v495
  %v502 = vmul.f32 %v448, %v495
  %v503 = vmul.f32 %v453, %v495
  %v504 = vmul.f32 %v456, %v495
  %v505 = vmul.f32 %v461, %v495
  %v506 = vmul.f32 %v464, %v495
  %v507 = vmul.f32 %v469, %v495
  %v508 = vmul.f32 %v472, %v495
  %v509 = vmul.f32 %v477, %v495
  %v510 = vmul.f32 %v480, %v495
  %v511 = vmul.f32 %v485, %v495
  %v512 = vmul.f32 %v488, %v495
  %v514 = vlaneseq
  %v515 = vshrl.u32 %v514, 7
  %v516 = vsub.s32 0, %v515
  %v517 = vrot.slane %v124, %v516
  %v519 = vadd.f32 %v497, %v517
  %v520 = vadd.f32 %v498, %v517
  %v521 = vadd.f32 %v499, %v517
  %v522 = vadd.f32 %v500, %v517
  %v523 = vadd.f32 %v501, %v517
  %v524 = vadd.f32 %v502, %v517
  %v525 = vadd.f32 %v503, %v517
  %v526 = vadd.f32 %v504, %v517
  %v527 = vadd.f32 %v505, %v517
  %v528 = vadd.f32 %v506, %v517
  %v529 = vadd.f32 %v507, %v517
  %v530 = vadd.f32 %v508, %v517
  %v531 = vadd.f32 %v509, %v517
  %v532 = vadd.f32 %v510, %v517
  %v533 = vadd.f32 %v511, %v517
  %v534 = vadd.f32 %v512, %v517
  %v535 = vmax.f32 %v519, 0.0
  %v536 = vmax.f32 %v520, 0.0
  %v537 = vmax.f32 %v521, 0.0
  %v538 = vmax.f32 %v522, 0.0
  %v539 = vmax.f32 %v523, 0.0
  %v540 = vmax.f32 %v524, 0.0
  %v541 = vmax.f32 %v525, 0.0
  %v542 = vmax.f32 %v526, 0.0
  %v543 = vmax.f32 %v527, 0.0
  %v544 = vmax.f32 %v528, 0.0
  %v545 = vmax.f32 %v529, 0.0
  %v546 = vmax.f32 %v530, 0.0
  %v547 = vmax.f32 %v531, 0.0
  %v548 = vmax.f32 %v532, 0.0
  %v549 = vmax.f32 %v533, 0.0
  %v550 = vmax.f32 %v534, 0.0
  %v551 = vpack.c.bf16 %v536, %v535
  %v552 = vpack.c.bf16 %v538, %v537
  %v553 = vpack.c.bf16 %v540, %v539
  %v554 = vpack.c.bf16 %v542, %v541
  %v555 = vpack.c.bf16 %v544, %v543
  %v556 = vpack.c.bf16 %v546, %v545
  %v557 = vpack.c.bf16 %v548, %v547
  %v558 = vpack.c.bf16 %v550, %v549
  %v559 = vld [vmem:[%s5] sm:$0xf]
  %v560 = vld [vmem:[%s5 + $0x4] sm:$0xf]
  %v561 = vld [vmem:[%s5 + $0x8] sm:$0xf]
  %v562 = vld [vmem:[%s5 + $0xc] sm:$0xf]
  %v563 = vld [vmem:[%s5 + $0x10] sm:$0xf]
  %v564 = vld [vmem:[%s5 + $0x14] sm:$0xf]
  %v565 = vld [vmem:[%s5 + $0x18] sm:$0xf]
  %v566 = vld [vmem:[%s5 + $0x1c] sm:$0xf]
  %v567 = vld [vmem:[%s5 + $0x20] sm:$0xf]
  %v568 = vld [vmem:[%s5 + $0x24] sm:$0xf]
  %v569 = vld [vmem:[%s5 + $0x28] sm:$0xf]
  %v570 = vld [vmem:[%s5 + $0x2c] sm:$0xf]
  %v571 = vld [vmem:[%s5 + $0x30] sm:$0xf]
  %v572 = vld [vmem:[%s5 + $0x34] sm:$0xf]
  %v573 = vld [vmem:[%s5 + $0x38] sm:$0xf]
  %v574 = vld [vmem:[%s5 + $0x3c] sm:$0xf]
  %v575 = vld [vmem:[%s6] sm:$0x1]
  %v576 = vld [vmem:[%s7] sm:$0x1]
  %v593 = vunpack.c.l.b16 %v559
  %v594 = vunpack.c.l.b16 %v560
  %v595 = vunpack.c.l.b16 %v561
  %v596 = vunpack.c.l.b16 %v562
  %v597 = vunpack.c.l.b16 %v563
  %v598 = vunpack.c.l.b16 %v564
  %v599 = vunpack.c.l.b16 %v565
  %v600 = vunpack.c.l.b16 %v566
  %v601 = vunpack.c.l.b16 %v567
  %v602 = vunpack.c.l.b16 %v568
  %v603 = vunpack.c.l.b16 %v569
  %v604 = vunpack.c.l.b16 %v570
  %v605 = vunpack.c.l.b16 %v571
  %v606 = vunpack.c.l.b16 %v572
  %v607 = vunpack.c.l.b16 %v573
  %v608 = vunpack.c.l.b16 %v574
  %v609 = vpack.c.b16 %v594, %v593
  %v610 = vpack.c.b16 %v596, %v595
  %v611 = vpack.c.b16 %v598, %v597
  %v612 = vpack.c.b16 %v600, %v599
  %v613 = vpack.c.b16 %v602, %v601
  %v614 = vpack.c.b16 %v604, %v603
  %v615 = vpack.c.b16 %v606, %v605
  %v616 = vpack.c.b16 %v608, %v607
  %625 = vmatprep.subr.bf16.mxu0 0
  %626 = vmatpush1.bf16.msra.mxu0 %v616
  %627 = vmatprep.subr.bf16.mxu0 0
  %628 = vmatpush1.bf16.msra.mxu0 %v615
  %629 = vmatprep.subr.bf16.mxu0 0
  %630 = vmatpush1.bf16.msra.mxu0 %v614
  %631 = vmatprep.subr.bf16.mxu0 0
  %632 = vmatpush1.bf16.msra.mxu0 %v613
  %633 = vmatprep.subr.bf16.mxu0 0
  %634 = vmatpush1.bf16.msra.mxu0 %v612
  %635 = vmatprep.subr.bf16.mxu0 0
  %636 = vmatpush1.bf16.msra.mxu0 %v611
  %637 = vmatprep.subr.bf16.mxu0 0
  %638 = vmatpush1.bf16.msra.mxu0 %v610
  %639 = vmatprep.subr.bf16.mxu0 0
  %640 = vmatpush1.bf16.msra.mxu0 %v609
  %641 = vmatprep.subr.bf16.mxu0 0
  %642 = vmatpush2.bf16.msra.mxu0 0
  %643 = vmatprep.subr.bf16.mxu0 0
  %644 = vmatpush2.bf16.msra.mxu0 0
  %645 = vmatprep.subr.bf16.mxu0 0
  %646 = vmatpush2.bf16.msra.mxu0 0
  %647 = vmatprep.subr.bf16.mxu0 0
  %648 = vmatpush2.bf16.msra.mxu0 0
  %649 = vmatprep.subr.bf16.mxu0 0
  %650 = vmatpush2.bf16.msra.mxu0 0
  %651 = vmatprep.subr.bf16.mxu0 0
  %652 = vmatpush2.bf16.msra.mxu0 0
  %653 = vmatprep.subr.bf16.mxu0 0
  %654 = vmatpush2.bf16.msra.mxu0 0
  %655 = vmatprep.subr.bf16.mxu0 0
  %656 = vmatpush2.bf16.msra.mxu0 0
  %657 = vmatprep.mubr.bf16.mxu0 0
  %658 = vmatmul.mubr.bf16.gmra.mxu0 %v551
  %v659 = vpop.f32.mrf.mxu0
  %v660 = vadd.f32 0.0, %v659
  %v661 = vpop.f32.mrf.mxu0
  %v662 = vpop.f32.mrf.mxu0
  %v663 = vadd.f32 0.0, %v662
  %v664 = vpop.f32.mrf.mxu0
  %665 = vmatprep.mubr.bf16.mxu0 0
  %666 = vmatmul.mubr.bf16.gmra.mxu0 %v552
  %v667 = vpop.f32.mrf.mxu0
  %v668 = vadd.f32 0.0, %v667
  %v669 = vpop.f32.mrf.mxu0
  %v670 = vpop.f32.mrf.mxu0
  %v671 = vadd.f32 0.0, %v670
  %v672 = vpop.f32.mrf.mxu0
  %673 = vmatprep.mubr.bf16.mxu0 0
  %674 = vmatmul.mubr.bf16.gmra.mxu0 %v553
  %v675 = vpop.f32.mrf.mxu0
  %v676 = vadd.f32 0.0, %v675
  %v677 = vpop.f32.mrf.mxu0
  %v678 = vpop.f32.mrf.mxu0
  %v679 = vadd.f32 0.0, %v678
  %v680 = vpop.f32.mrf.mxu0
  %681 = vmatprep.mubr.bf16.mxu0 0
  %682 = vmatmul.mubr.bf16.gmra.mxu0 %v554
  %v683 = vpop.f32.mrf.mxu0
  %v684 = vadd.f32 0.0, %v683
  %v685 = vpop.f32.mrf.mxu0
  %v686 = vpop.f32.mrf.mxu0
  %v687 = vadd.f32 0.0, %v686
  %v688 = vpop.f32.mrf.mxu0
  %689 = vmatprep.mubr.bf16.mxu0 0
  %690 = vmatmul.mubr.bf16.gmra.mxu0 %v555
  %v691 = vpop.f32.mrf.mxu0
  %v692 = vadd.f32 0.0, %v691
  %v693 = vpop.f32.mrf.mxu0
  %v694 = vpop.f32.mrf.mxu0
  %v695 = vadd.f32 0.0, %v694
  %v696 = vpop.f32.mrf.mxu0
  %697 = vmatprep.mubr.bf16.mxu0 0
  %698 = vmatmul.mubr.bf16.gmra.mxu0 %v556
  %v699 = vpop.f32.mrf.mxu0
  %v700 = vadd.f32 0.0, %v699
  %v701 = vpop.f32.mrf.mxu0
  %v702 = vpop.f32.mrf.mxu0
  %v703 = vadd.f32 0.0, %v702
  %v704 = vpop.f32.mrf.mxu0
  %705 = vmatprep.mubr.bf16.mxu0 0
  %706 = vmatmul.mubr.bf16.gmra.mxu0 %v557
  %v707 = vpop.f32.mrf.mxu0
  %v708 = vadd.f32 0.0, %v707
  %v709 = vpop.f32.mrf.mxu0
  %v710 = vpop.f32.mrf.mxu0
  %v711 = vadd.f32 0.0, %v710
  %v712 = vpop.f32.mrf.mxu0
  %713 = vmatprep.mubr.bf16.mxu0 0
  %714 = vmatmul.mubr.bf16.gmra.mxu0 %v558
  %v715 = vpop.f32.mrf.mxu0
  %v716 = vadd.f32 0.0, %v715
  %v717 = vpop.f32.mrf.mxu0
  %v718 = vpop.f32.mrf.mxu0
  %v719 = vadd.f32 0.0, %v718
  %v720 = vpop.f32.mrf.mxu0
  %721 = vdwg.mxu0
  %v722 = vpack.c.bf16 %v663, %v660
  %v723 = vpack.c.bf16 %v671, %v668
  %v724 = vpack.c.bf16 %v679, %v676
  %v725 = vpack.c.bf16 %v687, %v684
  %v726 = vpack.c.bf16 %v695, %v692
  %v727 = vpack.c.bf16 %v703, %v700
  %v728 = vpack.c.bf16 %v711, %v708
  %v729 = vpack.c.bf16 %v719, %v716
  %730 = vmatprep.subr.bf16.mxu0 0
  %731 = vmatpush1.bf16.msra.mxu0 %v729
  %732 = vmatprep.subr.bf16.mxu0 0
  %733 = vmatpush1.bf16.msra.mxu0 %v728
  %734 = vmatprep.subr.bf16.mxu0 0
  %735 = vmatpush1.bf16.msra.mxu0 %v727
  %736 = vmatprep.subr.bf16.mxu0 0
  %737 = vmatpush1.bf16.msra.mxu0 %v726
  %738 = vmatprep.subr.bf16.mxu0 0
  %739 = vmatpush1.bf16.msra.mxu0 %v725
  %740 = vmatprep.subr.bf16.mxu0 0
  %741 = vmatpush1.bf16.msra.mxu0 %v724
  %742 = vmatprep.subr.bf16.mxu0 0
  %743 = vmatpush1.bf16.msra.mxu0 %v723
  %744 = vmatprep.subr.bf16.mxu0 0
  %745 = vmatpush1.bf16.msra.mxu0 %v722
  %746 = vmatprep.subr.bf16.mxu0 0
  %747 = vmatpush2.bf16.msra.mxu0 0
  %748 = vmatprep.subr.bf16.mxu0 0
  %749 = vmatpush2.bf16.msra.mxu0 0
  %750 = vmatprep.subr.bf16.mxu0 0
  %751 = vmatpush2.bf16.msra.mxu0 0
  %752 = vmatprep.subr.bf16.mxu0 0
  %753 = vmatpush2.bf16.msra.mxu0 0
  %754 = vmatprep.subr.bf16.mxu0 0
  %755 = vmatpush2.bf16.msra.mxu0 0
  %756 = vmatprep.subr.bf16.mxu0 0
  %757 = vmatpush2.bf16.msra.mxu0 0
  %758 = vmatprep.subr.bf16.mxu0 0
  %759 = vmatpush2.bf16.msra.mxu0 0
  %760 = vmatprep.subr.bf16.mxu0 0
  %761 = vmatpush2.bf16.msra.mxu0 0
  %762 = vmatprep.mubr.bf16.mxu0 0
  %763 = vmatmul.mubr.bf16.gmra.mxu0 %v378
  %v764 = vpop.f32.mrf.mxu0
  %v765 = vadd.f32 0.0, %v764
  %v766 = vpop.f32.mrf.mxu0
  %v767 = vpop.f32.mrf.mxu0
  %v768 = vadd.f32 0.0, %v767
  %v769 = vpop.f32.mrf.mxu0
  %770 = vmatprep.mubr.bf16.mxu0 0
  %771 = vmatmul.mubr.bf16.gmra.mxu0 %v379
  %v772 = vpop.f32.mrf.mxu0
  %v773 = vadd.f32 0.0, %v772
  %v774 = vpop.f32.mrf.mxu0
  %v775 = vpop.f32.mrf.mxu0
  %v776 = vadd.f32 0.0, %v775
  %v777 = vpop.f32.mrf.mxu0
  %778 = vmatprep.mubr.bf16.mxu0 0
  %779 = vmatmul.mubr.bf16.gmra.mxu0 %v380
  %v780 = vpop.f32.mrf.mxu0
  %v781 = vadd.f32 0.0, %v780
  %v782 = vpop.f32.mrf.mxu0
  %v783 = vpop.f32.mrf.mxu0
  %v784 = vadd.f32 0.0, %v783
  %v785 = vpop.f32.mrf.mxu0
  %786 = vmatprep.mubr.bf16.mxu0 0
  %787 = vmatmul.mubr.bf16.gmra.mxu0 %v381
  %v788 = vpop.f32.mrf.mxu0
  %v789 = vadd.f32 0.0, %v788
  %v790 = vpop.f32.mrf.mxu0
  %v791 = vpop.f32.mrf.mxu0
  %v792 = vadd.f32 0.0, %v791
  %v793 = vpop.f32.mrf.mxu0
  %794 = vmatprep.mubr.bf16.mxu0 0
  %795 = vmatmul.mubr.bf16.gmra.mxu0 %v382
  %v796 = vpop.f32.mrf.mxu0
  %v797 = vadd.f32 0.0, %v796
  %v798 = vpop.f32.mrf.mxu0
  %v799 = vpop.f32.mrf.mxu0
  %v800 = vadd.f32 0.0, %v799
  %v801 = vpop.f32.mrf.mxu0
  %802 = vmatprep.mubr.bf16.mxu0 0
  %803 = vmatmul.mubr.bf16.gmra.mxu0 %v383
  %v804 = vpop.f32.mrf.mxu0
  %v805 = vadd.f32 0.0, %v804
  %v806 = vpop.f32.mrf.mxu0
  %v807 = vpop.f32.mrf.mxu0
  %v808 = vadd.f32 0.0, %v807
  %v809 = vpop.f32.mrf.mxu0
  %810 = vmatprep.mubr.bf16.mxu0 0
  %811 = vmatmul.mubr.bf16.gmra.mxu0 %v384
  %v812 = vpop.f32.mrf.mxu0
  %v813 = vadd.f32 0.0, %v812
  %v814 = vpop.f32.mrf.mxu0
  %v815 = vpop.f32.mrf.mxu0
  %v816 = vadd.f32 0.0, %v815
  %v817 = vpop.f32.mrf.mxu0
  %818 = vmatprep.mubr.bf16.mxu0 0
  %819 = vmatmul.mubr.bf16.gmra.mxu0 %v385
  %v820 = vpop.f32.mrf.mxu0
  %v821 = vadd.f32 0.0, %v820
  %v822 = vpop.f32.mrf.mxu0
  %v823 = vpop.f32.mrf.mxu0
  %v824 = vadd.f32 0.0, %v823
  %v825 = vpop.f32.mrf.mxu0
  %826 = vdwg.mxu0
  %v828 = vlaneseq
  %v829 = vshrl.u32 %v828, 7
  %v830 = vsub.s32 0, %v829
  %v831 = vrot.slane %v575, %v830
  %v833 = vmul.f32 %v765, %v831
  %v834 = vmul.f32 %v768, %v831
  %v835 = vmul.f32 %v773, %v831
  %v836 = vmul.f32 %v776, %v831
  %v837 = vmul.f32 %v781, %v831
  %v838 = vmul.f32 %v784, %v831
  %v839 = vmul.f32 %v789, %v831
  %v840 = vmul.f32 %v792, %v831
  %v841 = vmul.f32 %v797, %v831
  %v842 = vmul.f32 %v800, %v831
  %v843 = vmul.f32 %v805, %v831
  %v844 = vmul.f32 %v808, %v831
  %v845 = vmul.f32 %v813, %v831
  %v846 = vmul.f32 %v816, %v831
  %v847 = vmul.f32 %v821, %v831
  %v848 = vmul.f32 %v824, %v831
  %v850 = vlaneseq
  %v851 = vshrl.u32 %v850, 7
  %v852 = vsub.s32 0, %v851
  %v853 = vrot.slane %v576, %v852
  %v855 = vadd.f32 %v833, %v853
  %v856 = vadd.f32 %v834, %v853
  %v857 = vadd.f32 %v835, %v853
  %v858 = vadd.f32 %v836, %v853
  %v859 = vadd.f32 %v837, %v853
  %v860 = vadd.f32 %v838, %v853
  %v861 = vadd.f32 %v839, %v853
  %v862 = vadd.f32 %v840, %v853
  %v863 = vadd.f32 %v841, %v853
  %v864 = vadd.f32 %v842, %v853
  %v865 = vadd.f32 %v843, %v853
  %v866 = vadd.f32 %v844, %v853
  %v867 = vadd.f32 %v845, %v853
  %v868 = vadd.f32 %v846, %v853
  %v869 = vadd.f32 %v847, %v853
  %v870 = vadd.f32 %v848, %v853
  %v871 = vmax.f32 %v855, 0.0
  %v872 = vmax.f32 %v856, 0.0
  %v873 = vmax.f32 %v857, 0.0
  %v874 = vmax.f32 %v858, 0.0
  %v875 = vmax.f32 %v859, 0.0
  %v876 = vmax.f32 %v860, 0.0
  %v877 = vmax.f32 %v861, 0.0
  %v878 = vmax.f32 %v862, 0.0
  %v879 = vmax.f32 %v863, 0.0
  %v880 = vmax.f32 %v864, 0.0
  %v881 = vmax.f32 %v865, 0.0
  %v882 = vmax.f32 %v866, 0.0
  %v883 = vmax.f32 %v867, 0.0
  %v884 = vmax.f32 %v868, 0.0
  %v885 = vmax.f32 %v869, 0.0
  %v886 = vmax.f32 %v870, 0.0
  %v887 = vpack.c.bf16 %v872, %v871
  %v888 = vpack.c.bf16 %v874, %v873
  %v889 = vpack.c.bf16 %v876, %v875
  %v890 = vpack.c.bf16 %v878, %v877
  %v891 = vpack.c.bf16 %v880, %v879
  %v892 = vpack.c.bf16 %v882, %v881
  %v893 = vpack.c.bf16 %v884, %v883
  %v894 = vpack.c.bf16 %v886, %v885
  %v895 = vld [vmem:[%s8] sm:$0xf]
  %v896 = vld [vmem:[%s8 + $0x4] sm:$0xf]
  %v897 = vld [vmem:[%s8 + $0x8] sm:$0xf]
  %v898 = vld [vmem:[%s8 + $0xc] sm:$0xf]
  %v899 = vld [vmem:[%s8 + $0x10] sm:$0xf]
  %v900 = vld [vmem:[%s8 + $0x14] sm:$0xf]
  %v901 = vld [vmem:[%s8 + $0x18] sm:$0xf]
  %v902 = vld [vmem:[%s8 + $0x1c] sm:$0xf]
  %v903 = vld [vmem:[%s8 + $0x20] sm:$0xf]
  %v904 = vld [vmem:[%s8 + $0x24] sm:$0xf]
  %v905 = vld [vmem:[%s8 + $0x28] sm:$0xf]
  %v906 = vld [vmem:[%s8 + $0x2c] sm:$0xf]
  %v907 = vld [vmem:[%s8 + $0x30] sm:$0xf]
  %v908 = vld [vmem:[%s8 + $0x34] sm:$0xf]
  %v909 = vld [vmem:[%s8 + $0x38] sm:$0xf]
  %v910 = vld [vmem:[%s8 + $0x3c] sm:$0xf]
  %v911 = vld [vmem:[%s9] sm:$0x1]
  %v928 = vunpack.c.l.b16 %v895
  %v929 = vunpack.c.l.b16 %v896
  %v930 = vunpack.c.l.b16 %v897
  %v931 = vunpack.c.l.b16 %v898
  %v932 = vunpack.c.l.b16 %v899
  %v933 = vunpack.c.l.b16 %v900
  %v934 = vunpack.c.l.b16 %v901
  %v935 = vunpack.c.l.b16 %v902
  %v936 = vunpack.c.l.b16 %v903
  %v937 = vunpack.c.l.b16 %v904
  %v938 = vunpack.c.l.b16 %v905
  %v939 = vunpack.c.l.b16 %v906
  %v940 = vunpack.c.l.b16 %v907
  %v941 = vunpack.c.l.b16 %v908
  %v942 = vunpack.c.l.b16 %v909
  %v943 = vunpack.c.l.b16 %v910
  %v944 = vpack.c.b16 %v929, %v928
  %v945 = vpack.c.b16 %v931, %v930
  %v946 = vpack.c.b16 %v933, %v932
  %v947 = vpack.c.b16 %v935, %v934
  %v948 = vpack.c.b16 %v937, %v936
  %v949 = vpack.c.b16 %v939, %v938
  %v950 = vpack.c.b16 %v941, %v940
  %v951 = vpack.c.b16 %v943, %v942
  %960 = vmatprep.subr.bf16.mxu0 0
  %961 = vmatpush1.bf16.msra.mxu0 %v951
  %962 = vmatprep.subr.bf16.mxu0 0
  %963 = vmatpush1.bf16.msra.mxu0 %v950
  %964 = vmatprep.subr.bf16.mxu0 0
  %965 = vmatpush1.bf16.msra.mxu0 %v949
  %966 = vmatprep.subr.bf16.mxu0 0
  %967 = vmatpush1.bf16.msra.mxu0 %v948
  %968 = vmatprep.subr.bf16.mxu0 0
  %969 = vmatpush1.bf16.msra.mxu0 %v947
  %970 = vmatprep.subr.bf16.mxu0 0
  %971 = vmatpush1.bf16.msra.mxu0 %v946
  %972 = vmatprep.subr.bf16.mxu0 0
  %973 = vmatpush1.bf16.msra.mxu0 %v945
  %974 = vmatprep.subr.bf16.mxu0 0
  %975 = vmatpush1.bf16.msra.mxu0 %v944
  %976 = vmatprep.subr.bf16.mxu0 0
  %977 = vmatpush2.bf16.msra.mxu0 0
  %978 = vmatprep.subr.bf16.mxu0 0
  %979 = vmatpush2.bf16.msra.mxu0 0
  %980 = vmatprep.subr.bf16.mxu0 0
  %981 = vmatpush2.bf16.msra.mxu0 0
  %982 = vmatprep.subr.bf16.mxu0 0
  %983 = vmatpush2.bf16.msra.mxu0 0
  %984 = vmatprep.subr.bf16.mxu0 0
  %985 = vmatpush2.bf16.msra.mxu0 0
  %986 = vmatprep.subr.bf16.mxu0 0
  %987 = vmatpush2.bf16.msra.mxu0 0
  %988 = vmatprep.subr.bf16.mxu0 0
  %989 = vmatpush2.bf16.msra.mxu0 0
  %990 = vmatprep.subr.bf16.mxu0 0
  %991 = vmatpush2.bf16.msra.mxu0 0
  %992 = vmatprep.mubr.bf16.mxu0 0
  %993 = vmatmul.mubr.bf16.gmra.mxu0 %v887
  %v994 = vpop.f32.mrf.mxu0
  %v995 = vadd.f32 0.0, %v994
  %v996 = vpop.f32.mrf.mxu0
  %v997 = vpop.f32.mrf.mxu0
  %v998 = vadd.f32 0.0, %v997
  %v999 = vpop.f32.mrf.mxu0
  %1000 = vmatprep.mubr.bf16.mxu0 0
  %1001 = vmatmul.mubr.bf16.gmra.mxu0 %v888
  %v1002 = vpop.f32.mrf.mxu0
  %v1003 = vadd.f32 0.0, %v1002
  %v1004 = vpop.f32.mrf.mxu0
  %v1005 = vpop.f32.mrf.mxu0
  %v1006 = vadd.f32 0.0, %v1005
  %v1007 = vpop.f32.mrf.mxu0
  %1008 = vmatprep.mubr.bf16.mxu0 0
  %1009 = vmatmul.mubr.bf16.gmra.mxu0 %v889
  %v1010 = vpop.f32.mrf.mxu0
  %v1011 = vadd.f32 0.0, %v1010
  %v1012 = vpop.f32.mrf.mxu0
  %v1013 = vpop.f32.mrf.mxu0
  %v1014 = vadd.f32 0.0, %v1013
  %v1015 = vpop.f32.mrf.mxu0
  %1016 = vmatprep.mubr.bf16.mxu0 0
  %1017 = vmatmul.mubr.bf16.gmra.mxu0 %v890
  %v1018 = vpop.f32.mrf.mxu0
  %v1019 = vadd.f32 0.0, %v1018
  %v1020 = vpop.f32.mrf.mxu0
  %v1021 = vpop.f32.mrf.mxu0
  %v1022 = vadd.f32 0.0, %v1021
  %v1023 = vpop.f32.mrf.mxu0
  %1024 = vmatprep.mubr.bf16.mxu0 0
  %1025 = vmatmul.mubr.bf16.gmra.mxu0 %v891
  %v1026 = vpop.f32.mrf.mxu0
  %v1027 = vadd.f32 0.0, %v1026
  %v1028 = vpop.f32.mrf.mxu0
  %v1029 = vpop.f32.mrf.mxu0
  %v1030 = vadd.f32 0.0, %v1029
  %v1031 = vpop.f32.mrf.mxu0
  %1032 = vmatprep.mubr.bf16.mxu0 0
  %1033 = vmatmul.mubr.bf16.gmra.mxu0 %v892
  %v1034 = vpop.f32.mrf.mxu0
  %v1035 = vadd.f32 0.0, %v1034
  %v1036 = vpop.f32.mrf.mxu0
  %v1037 = vpop.f32.mrf.mxu0
  %v1038 = vadd.f32 0.0, %v1037
  %v1039 = vpop.f32.mrf.mxu0
  %1040 = vmatprep.mubr.bf16.mxu0 0
  %1041 = vmatmul.mubr.bf16.gmra.mxu0 %v893
  %v1042 = vpop.f32.mrf.mxu0
  %v1043 = vadd.f32 0.0, %v1042
  %v1044 = vpop.f32.mrf.mxu0
  %v1045 = vpop.f32.mrf.mxu0
  %v1046 = vadd.f32 0.0, %v1045
  %v1047 = vpop.f32.mrf.mxu0
  %1048 = vmatprep.mubr.bf16.mxu0 0
  %1049 = vmatmul.mubr.bf16.gmra.mxu0 %v894
  %v1050 = vpop.f32.mrf.mxu0
  %v1051 = vadd.f32 0.0, %v1050
  %v1052 = vpop.f32.mrf.mxu0
  %v1053 = vpop.f32.mrf.mxu0
  %v1054 = vadd.f32 0.0, %v1053
  %v1055 = vpop.f32.mrf.mxu0
  %1056 = vdwg.mxu0
  %v1057 = vpack.c.bf16 %v998, %v995
  %v1058 = vpack.c.bf16 %v1006, %v1003
  %v1059 = vpack.c.bf16 %v1014, %v1011
  %v1060 = vpack.c.bf16 %v1022, %v1019
  %v1061 = vpack.c.bf16 %v1030, %v1027
  %v1062 = vpack.c.bf16 %v1038, %v1035
  %v1063 = vpack.c.bf16 %v1046, %v1043
  %v1064 = vpack.c.bf16 %v1054, %v1051
  %v1066 = vlaneseq
  %v1067 = vshrl.u32 %v1066, 7
  %v1068 = vsub.s32 0, %v1067
  %v1069 = vrot.slane %v911, %v1068
  %1071 = vmatprep.subr.bf16.mxu0 0
  %1072 = vmatpush1.bf16.msra.mxu0 %v1064
  %1073 = vmatprep.subr.bf16.mxu0 0
  %1074 = vmatpush1.bf16.msra.mxu0 %v1063
  %1075 = vmatprep.subr.bf16.mxu0 0
  %1076 = vmatpush1.bf16.msra.mxu0 %v1062
  %1077 = vmatprep.subr.bf16.mxu0 0
  %1078 = vmatpush1.bf16.msra.mxu0 %v1061
  %1079 = vmatprep.subr.bf16.mxu0 0
  %1080 = vmatpush1.bf16.msra.mxu0 %v1060
  %1081 = vmatprep.subr.bf16.mxu0 0
  %1082 = vmatpush1.bf16.msra.mxu0 %v1059
  %1083 = vmatprep.subr.bf16.mxu0 0
  %1084 = vmatpush1.bf16.msra.mxu0 %v1058
  %1085 = vmatprep.subr.bf16.mxu0 0
  %1086 = vmatpush1.bf16.msra.mxu0 %v1057
  %1087 = vmatprep.subr.bf16.mxu0 0
  %1088 = vmatpush2.bf16.msra.mxu0 0
  %1089 = vmatprep.subr.bf16.mxu0 0
  %1090 = vmatpush2.bf16.msra.mxu0 0
  %1091 = vmatprep.subr.bf16.mxu0 0
  %1092 = vmatpush2.bf16.msra.mxu0 0
  %1093 = vmatprep.subr.bf16.mxu0 0
  %1094 = vmatpush2.bf16.msra.mxu0 0
  %1095 = vmatprep.subr.bf16.mxu0 0
  %1096 = vmatpush2.bf16.msra.mxu0 0
  %1097 = vmatprep.subr.bf16.mxu0 0
  %1098 = vmatpush2.bf16.msra.mxu0 0
  %1099 = vmatprep.subr.bf16.mxu0 0
  %1100 = vmatpush2.bf16.msra.mxu0 0
  %1101 = vmatprep.subr.bf16.mxu0 0
  %1102 = vmatpush2.bf16.msra.mxu0 0
  %1103 = vmatprep.mubr.bf16.mxu0 0
  %1104 = vmatmul.mubr.bf16.gmra.mxu0 %v378
  %v1105 = vpop.f32.mrf.mxu0
  %v1106 = vadd.f32 %v1069, %v1105
  %v1107 = vpop.f32.mrf.mxu0
  %v1108 = vpop.f32.mrf.mxu0
  %v1109 = vadd.f32 %v1069, %v1108
  %v1110 = vpop.f32.mrf.mxu0
  %1111 = vmatprep.mubr.bf16.mxu0 0
  %1112 = vmatmul.mubr.bf16.gmra.mxu0 %v379
  %v1113 = vpop.f32.mrf.mxu0
  %v1114 = vadd.f32 %v1069, %v1113
  %v1115 = vpop.f32.mrf.mxu0
  %v1116 = vpop.f32.mrf.mxu0
  %v1117 = vadd.f32 %v1069, %v1116
  %v1118 = vpop.f32.mrf.mxu0
  %1119 = vmatprep.mubr.bf16.mxu0 0
  %1120 = vmatmul.mubr.bf16.gmra.mxu0 %v380
  %v1121 = vpop.f32.mrf.mxu0
  %v1122 = vadd.f32 %v1069, %v1121
  %v1123 = vpop.f32.mrf.mxu0
  %v1124 = vpop.f32.mrf.mxu0
  %v1125 = vadd.f32 %v1069, %v1124
  %v1126 = vpop.f32.mrf.mxu0
  %1127 = vmatprep.mubr.bf16.mxu0 0
  %1128 = vmatmul.mubr.bf16.gmra.mxu0 %v381
  %v1129 = vpop.f32.mrf.mxu0
  %v1130 = vadd.f32 %v1069, %v1129
  %v1131 = vpop.f32.mrf.mxu0
  %v1132 = vpop.f32.mrf.mxu0
  %v1133 = vadd.f32 %v1069, %v1132
  %v1134 = vpop.f32.mrf.mxu0
  %1135 = vmatprep.mubr.bf16.mxu0 0
  %1136 = vmatmul.mubr.bf16.gmra.mxu0 %v382
  %v1137 = vpop.f32.mrf.mxu0
  %v1138 = vadd.f32 %v1069, %v1137
  %v1139 = vpop.f32.mrf.mxu0
  %v1140 = vpop.f32.mrf.mxu0
  %v1141 = vadd.f32 %v1069, %v1140
  %v1142 = vpop.f32.mrf.mxu0
  %1143 = vmatprep.mubr.bf16.mxu0 0
  %1144 = vmatmul.mubr.bf16.gmra.mxu0 %v383
  %v1145 = vpop.f32.mrf.mxu0
  %v1146 = vadd.f32 %v1069, %v1145
  %v1147 = vpop.f32.mrf.mxu0
  %v1148 = vpop.f32.mrf.mxu0
  %v1149 = vadd.f32 %v1069, %v1148
  %v1150 = vpop.f32.mrf.mxu0
  %1151 = vmatprep.mubr.bf16.mxu0 0
  %1152 = vmatmul.mubr.bf16.gmra.mxu0 %v384
  %v1153 = vpop.f32.mrf.mxu0
  %v1154 = vadd.f32 %v1069, %v1153
  %v1155 = vpop.f32.mrf.mxu0
  %v1156 = vpop.f32.mrf.mxu0
  %v1157 = vadd.f32 %v1069, %v1156
  %v1158 = vpop.f32.mrf.mxu0
  %1159 = vmatprep.mubr.bf16.mxu0 0
  %1160 = vmatmul.mubr.bf16.gmra.mxu0 %v385
  %v1161 = vpop.f32.mrf.mxu0
  %v1162 = vadd.f32 %v1069, %v1161
  %v1163 = vpop.f32.mrf.mxu0
  %v1164 = vpop.f32.mrf.mxu0
  %v1165 = vadd.f32 %v1069, %v1164
  %v1166 = vpop.f32.mrf.mxu0
  %1167 = vdwg.mxu0
  %1168 = vst [vmem:[%s10] sm:$0xff] %v1106
  %1169 = vst [vmem:[%s10 + $0x8] sm:$0xff] %v1109
  %1170 = vst [vmem:[%s10 + $0x10] sm:$0xff] %v1114
  %1171 = vst [vmem:[%s10 + $0x18] sm:$0xff] %v1117
  %1172 = vst [vmem:[%s10 + $0x20] sm:$0xff] %v1122
  %1173 = vst [vmem:[%s10 + $0x28] sm:$0xff] %v1125
  %1174 = vst [vmem:[%s10 + $0x30] sm:$0xff] %v1130
  %1175 = vst [vmem:[%s10 + $0x38] sm:$0xff] %v1133
  %1176 = vst [vmem:[%s10 + $0x40] sm:$0xff] %v1138
  %1177 = vst [vmem:[%s10 + $0x48] sm:$0xff] %v1141
  %1178 = vst [vmem:[%s10 + $0x50] sm:$0xff] %v1146
  %1179 = vst [vmem:[%s10 + $0x58] sm:$0xff] %v1149
  %1180 = vst [vmem:[%s10 + $0x60] sm:$0xff] %v1154
  %1181 = vst [vmem:[%s10 + $0x68] sm:$0xff] %v1157
  %1182 = vst [vmem:[%s10 + $0x70] sm:$0xff] %v1162
  %1183 = vst [vmem:[%s10 + $0x78] sm:$0xff] %v1165
  // Predicated region
  $region72: #{_forward.1} parent=0 // pred_check
    _
  $region73: #{_forward.1} parent=0 // pred_check_branch
    %1185 = sbr.rel (0) target = $region75
  $region74: #{_forward.1} parent=0 // pred_region
    _
  $region75: #{_forward.1} parent=0 // pred_fallthru
    _
  // Predicated region
  $region76: #{_forward.1} parent=0 // pred_check
    _
  $region77: #{_forward.1} parent=0 // pred_check_branch
    %1187 = sbr.rel (0) target = $region79
  $region78: #{_forward.1} parent=0 // pred_region
    _
  $region79: #{_forward.1} parent=0 // pred_fallthru
    _
  %1188 = vsyncmov [#allocation3]
  %s1189 = vpop.sfrf %1188
  %p1190 = scmp.eq.s32.totalorder %s1189, 0
  %p1191 = pneg %p1190
  %1193 = shalt.err (%p1191)

</llo_original>
